<compile_context>
chip_gen: v7x
topology: tpu7x:2x2x1
jax: 0.10.0
libtpu: 0.0.40
codegen_flags: <defaults>
</compile_context>

<pallas_src>
import functools

import jax
import jax.numpy as jnp
from jax.experimental import pallas as pl
from jax.experimental.pallas import tpu as pltpu

_TARGET_BLOCK_BYTES = 2 * 1024 * 1024  # per-input block; 2 inputs x 2 buffers = 8 MiB VMEM


def _pair_sumsq_kernel(x_ref, y_ref, o_ref, *, feat, tf):
    """Accumulate per-sample sum of squared differences over feature tiles.

    x_ref / y_ref: (BB, TF) VMEM tiles.  o_ref: (BB, 1) f32 output block that is
    revisited (and hence VMEM-resident) across the trailing feature grid axis.
    """
    k = pl.program_id(1)

    @pl.when(k == 0)
    def _init():
        o_ref[...] = jnp.zeros_like(o_ref)

    d = x_ref[...].astype(jnp.float32) - y_ref[...].astype(jnp.float32)
    sq = d * d
    if feat % tf != 0:
        # Partial last feature tile: zero the out-of-range lanes (their contents
        # are undefined block padding).  Static check -> no cost when F % TF == 0.
        lane = jax.lax.broadcasted_iota(jnp.int32, sq.shape, 1) + k * tf
        sq = jnp.where(lane < feat, sq, 0.0)
    # Single vectorized (BB, TF) -> (BB, 1) reduction per tile.
    o_ref[...] += jnp.sum(sq, axis=-1, keepdims=True)


def _pair_sum_sq(x, y):
    """Per-sample sum((x - y)**2).  x, y: (bsz, F) (any float dtype) -> (bsz,) f32."""
    bsz, feat = x.shape
    itemsize = max(jnp.dtype(x.dtype).itemsize, jnp.dtype(y.dtype).itemsize)

    # Batch rows per block: 8 fills the sublanes when bsz >= 8; smaller bsz uses
    # the whole batch (sublane waste is negligible at such tiny sizes).
    bb = bsz if bsz <= 8 else 8
    # Lane tile: multiple of 128, sized so one input block is ~2 MiB.
    target_elems = max(128, (_TARGET_BLOCK_BYTES // itemsize) // bb)
    if feat <= target_elems:
        tf = feat                              # whole feature axis, one lane block
    else:
        tf = max(128, (target_elems // 128) * 128)

    grid = (pl.cdiv(bsz, bb), pl.cdiv(feat, tf))
    kernel = functools.partial(_pair_sumsq_kernel, feat=feat, tf=tf)

    out = pl.pallas_call(
        kernel,
        out_shape=jax.ShapeDtypeStruct((bsz, 1), jnp.float32),
        grid=grid,
        in_specs=[
            pl.BlockSpec((bb, tf), lambda b, k: (b, k)),
            pl.BlockSpec((bb, tf), lambda b, k: (b, k)),
        ],
        out_specs=pl.BlockSpec((bb, 1), lambda b, k: (b, 0)),
        compiler_params=pltpu.CompilerParams(
            dimension_semantics=("parallel", "arbitrary")),
        cost_estimate=pl.CostEstimate(
            flops=3 * bsz * feat,
            transcendentals=0,
            bytes_accessed=bsz * feat * (jnp.dtype(x.dtype).itemsize
                                         + jnp.dtype(y.dtype).itemsize) + bsz * 4),
    )(x, y)
    return out[:, 0]


def semckd_loss(s_value, f_target, weight):
    """s_value / f_target: nested lists [num_stu][num_tea] of (bsz, C, H, W) arrays
    (feature sizes may differ per pair).  weight: (bsz, num_stu, num_tea)."""
    num_stu = len(s_value)
    num_tea = len(s_value[0])
    bsz = weight.shape[0]

    per_stu = []
    for i in range(num_stu):
        per_tea = []
        for j in range(num_tea):
            x = s_value[i][j].reshape(bsz, -1)   # free contiguous reshape, native dtype
            y = f_target[i][j].reshape(bsz, -1)
            feat = x.shape[1]
            sums = _pair_sum_sq(x, y)            # (bsz,) f32 sum of squared diffs
            per_tea.append(sums / jnp.float32(feat))   # per-sample MSE (mean over features)
        per_stu.append(jnp.stack(per_tea, axis=-1))    # (bsz, num_tea)
    ind_loss = jnp.stack(per_stu, axis=1)              # (bsz, num_stu, num_tea)

    # Tiny contraction done in plain JAX, matching the PyTorch forward exactly.
    return jnp.sum(weight.astype(jnp.float32) * ind_loss) / jnp.float32(bsz * num_stu)


def semckd_loss_ref(s_value, f_target, weight):
    """Pure-JAX reference matching the PyTorch forward exactly."""
    num_stu = len(s_value)
    num_tea = len(s_value[0])
    bsz = weight.shape[0]
    ind = jnp.zeros((bsz, num_stu, num_tea), jnp.float32)
    for i in range(num_stu):
        for j in range(num_tea):
            mse = jnp.mean(
                jnp.square(s_value[i][j].astype(jnp.float32)
                           - f_target[i][j].astype(jnp.float32)).reshape(bsz, -1),
                axis=-1)
            ind = ind.at[:, i, j].set(mse)
    return jnp.sum(weight.astype(jnp.float32) * ind) / (1.0 * bsz * num_stu)


if __name__ == "__main__":
    key = jax.random.PRNGKey(0)
    bsz, num_stu, num_tea = 2, 2, 3
    C, H, W = 4, 8, 8

    keys = jax.random.split(key, 2 * num_stu * num_tea + 1)
    kidx = 0
    s_value, f_target = [], []
    for i in range(num_stu):
        s_row, f_row = [], []
        for j in range(num_tea):
            s_row.append(jax.random.normal(keys[kidx], (bsz, C, H, W), jnp.float32)); kidx += 1
            f_row.append(jax.random.normal(keys[kidx], (bsz, C, H, W), jnp.float32)); kidx += 1
        s_value.append(s_row)
        f_target.append(f_row)
    # attention-style weights (softmax over teachers, like SemCKD produces)
    weight = jax.nn.softmax(
        jax.random.normal(keys[kidx], (bsz, num_stu, num_tea), jnp.float32), axis=-1)

    loss = semckd_loss(s_value, f_target, weight)
    jax.block_until_ready(loss)

    ref = semckd_loss_ref(s_value, f_target, weight)
    assert jnp.allclose(loss, ref, rtol=1e-5, atol=1e-6), (loss, ref)

    print("KERNEL_OK")
</pallas_src>

<mosaic_0001>
module attributes {stable_mosaic.version = 11 : i64} {
  func.func @_pair_sumsq_kernel(%arg0: i32, %arg1: i32, %arg2: memref<2x256xf32, #tpu.memory_space<vmem>>, %arg3: memref<2x256xf32, #tpu.memory_space<vmem>>, %arg4: memref<2x1xf32, #tpu.memory_space<vmem>>) attributes {dimension_semantics = [#tpu.dimension_semantics<parallel>, #tpu.dimension_semantics<arbitrary>], iteration_bounds = array<i64: 1, 1>, scalar_prefetch = 0 : i64, scratch_operands = 0 : i64, tpu.core_type = #tpu.core_type<tc>, window_params = [{transform_indices = @transform_0, window_bounds = array<i64: 2, 256>}, {transform_indices = @transform_1, window_bounds = array<i64: 2, 256>}, {transform_indices = @transform_2, window_bounds = array<i64: 2, 1>}]} {
    %c0_i32 = arith.constant 0 : i32
    %0 = arith.cmpi eq, %arg1, %c0_i32 : i32
    %1 = arith.extui %0 : i1 to i32
    %c0_i32_0 = arith.constant 0 : i32
    %2 = arith.cmpi ne, %1, %c0_i32_0 : i32
    scf.if %2 {
      %cst_8 = arith.constant 0.000000e+00 : f32
      %12 = vector.broadcast %cst_8 : f32 to vector<2x1xf32>
      %c0_9 = arith.constant 0 : index
      %c0_10 = arith.constant 0 : index
      %13 = vector.load %arg4[%c0_9, %c0_10] : memref<2x1xf32, #tpu.memory_space<vmem>>, vector<2x1xf32>
      tpu.vector_store %arg4[%c0_9, %c0_10], %12 {strides = array<i32>} : memref<2x1xf32, #tpu.memory_space<vmem>>, vector<2x1xf32>,
    } else {
    }
    %c0 = arith.constant 0 : index
    %c0_1 = arith.constant 0 : index
    %3 = vector.load %arg2[%c0, %c0_1] : memref<2x256xf32, #tpu.memory_space<vmem>>, vector<2x256xf32>
    %c0_2 = arith.constant 0 : index
    %c0_3 = arith.constant 0 : index
    %4 = vector.load %arg3[%c0_2, %c0_3] : memref<2x256xf32, #tpu.memory_space<vmem>>, vector<2x256xf32>
    %5 = arith.subf %3, %4 : vector<2x256xf32>
    %6 = arith.mulf %5, %5 : vector<2x256xf32>
    %c0_4 = arith.constant 0 : index
    %c0_5 = arith.constant 0 : index
    %7 = vector.load %arg4[%c0_4, %c0_5] : memref<2x1xf32, #tpu.memory_space<vmem>>, vector<2x1xf32>
    %cst = arith.constant dense<0.000000e+00> : vector<2xf32>
    %8 = vector.multi_reduction <add>, %6, %cst [1] : vector<2x256xf32> to vector<2xf32>
    %9 = vector.shape_cast %8 : vector<2xf32> to vector<2x1xf32>
    %10 = arith.addf %7, %9 : vector<2x1xf32>
    %c0_6 = arith.constant 0 : index
    %c0_7 = arith.constant 0 : index
    %11 = vector.load %arg4[%c0_6, %c0_7] : memref<2x1xf32, #tpu.memory_space<vmem>>, vector<2x1xf32>
    tpu.vector_store %arg4[%c0_6, %c0_7], %10 {strides = array<i32>} : memref<2x1xf32, #tpu.memory_space<vmem>>, vector<2x1xf32>,
    return
  }
  func.func @transform_0(%arg0: i32, %arg1: i32) -> (i32, i32) {
    %c0_i32 = arith.constant 0 : i32
    return %arg0, %arg1 : i32, i32
  }
  func.func @transform_1(%arg0: i32, %arg1: i32) -> (i32, i32) {
    %c0_i32 = arith.constant 0 : i32
    return %arg0, %arg1 : i32, i32
  }
  func.func @transform_2(%arg0: i32, %arg1: i32) -> (i32, i32) {
    %c0_i32 = arith.constant 0 : i32
    %c0_i32_0 = arith.constant 0 : i32
    return %arg0, %c0_i32 : i32, i32
  }
}

</mosaic_0001>

<llo_original>
// kernel: tpu_custom_call.1
$region0: #{tpu_custom_call.1}
  #allocation0 [shape = 'u32[]', space=smem, size = 0x4, offset = 0x4, fixed_abs, tag = 'smem constant byte address 0x4 - core index']
  #allocation1 [shape = 'u32[144,128]{1,0:T(1,128)}', space=vmem, size = 0x12000, scoped, tag = 'internal scratch']
  %s0 = inlined_call_operand.hbm [shape: f32[2,256], index: 0, kind: input, shape index: {}]
  %s1 = inlined_call_operand.hbm [shape: f32[2,256], index: 1, kind: input, shape index: {}]
  %s2 = inlined_call_operand.vmem [shape: f32[2,1], index: 2, kind: output, shape index: {}]
  %s3 = sld [smem:[#allocation0]]
  $region30: #{tpu_custom_call.1} parent=0
    _
  %s5 = ssub.s32 1, %s3
  %s6 = scalar_select 0, %s5, %s3
  $region1: #{tpu_custom_call.1} parent=0
    #allocation2 [shape = 'u8[2048]{0}', space=vmem, size = 0x800, scoped, tag = 'input window, operand 0, single buffered']
    #allocation3 [shape = 's32[1]{0}', space=sflag, size = 0x4, scoped, tag = 'scoped memory for tpu_custom_call.1']
    #allocation4 [shape = 'u8[2048]{0}', space=vmem, size = 0x800, scoped, tag = 'input window, operand 1, single buffered']
    #allocation5 [shape = 's32[1]{0}', space=sflag, size = 0x4, scoped, tag = 'scoped memory for tpu_custom_call.1']
    %7 = vsyncpa [#allocation3], 0
    %8 = vsyncpa [#allocation5], 0
    // Predicated region
    $region2: #{tpu_custom_call.1} parent=1 // pred_check
      _
    $region3: #{tpu_custom_call.1} parent=1 // pred_check_branch
      %10 = sbr.rel (0) target = $region5
    $region4: #{tpu_custom_call.1} parent=1 // pred_region
      %s12 = ssub.s32 64, 64
      %13 = vsyncadd [#allocation3], %s12
      %s15 = sshll.u32 [#allocation2], 4
      %s16 = int_to_ptr.vmem [resolvable:$true] %s15
      %18 = dma.hbm_to_vmem [thread:$0]  %s0, 64, %s16, [#allocation3]
    $region5: #{tpu_custom_call.1} parent=1 // pred_fallthru
      _
    // Predicated region
    $region6: #{tpu_custom_call.1} parent=1 // pred_check
      _
    $region7: #{tpu_custom_call.1} parent=1 // pred_check_branch
      %20 = sbr.rel (0) target = $region9
    $region8: #{tpu_custom_call.1} parent=1 // pred_region
      %s22 = ssub.s32 64, 64
      %23 = vsyncadd [#allocation5], %s22
      %s25 = sshll.u32 [#allocation4], 4
      %s26 = int_to_ptr.vmem [resolvable:$true] %s25
      %28 = dma.hbm_to_vmem [thread:$0]  %s1, 64, %s26, [#allocation5]
    $region9: #{tpu_custom_call.1} parent=1 // pred_fallthru
      _
    // Predicated region
    $region10: #{tpu_custom_call.1} parent=1 // pred_check
      _
    $region11: #{tpu_custom_call.1} parent=1 // pred_check_branch
      %30 = sbr.rel (0) target = $region13
    $region12: #{tpu_custom_call.1} parent=1 // pred_region
      %31 = dma.done [#allocation3], 64
    $region13: #{tpu_custom_call.1} parent=1 // pred_fallthru
      _
    // Predicated region
    $region14: #{tpu_custom_call.1} parent=1 // pred_check
      _
    $region15: #{tpu_custom_call.1} parent=1 // pred_check_branch
      %33 = sbr.rel (0) target = $region17
    $region16: #{tpu_custom_call.1} parent=1 // pred_region
      %34 = dma.done [#allocation5], 64
    $region17: #{tpu_custom_call.1} parent=1 // pred_fallthru
      _
    %p35 = scmp.eq.s32.totalorder 0, 0
    // Predicated region
    $region18: #{tpu_custom_call.1} parent=1 // pred_check
      %p36 = pneg %p35
    $region19: #{tpu_custom_call.1} parent=1 // pred_check_branch
      %38 = sbr.rel (%p36) target = $region21
    $region20: #{tpu_custom_call.1} parent=1 // pred_region
      %vm39 = vcmask 1024
      %40 = vst.msk [vmem:[%s2] sm:$0x3] %vm39, 0.0
    $region21: #{tpu_custom_call.1} parent=1 // pred_fallthru
      _
    %v41 = vld [vmem:[#allocation2] sm:$0xf]
    %v42 = vld [vmem:[#allocation4] sm:$0xf]
    %v43 = vsub.f32 %v41, %v42
    %v44 = vmul.f32 %v43, %v43
    %v45 = vld [vmem:[%s2] sm:$0x3]
    %v48 = vunpack.c.l.s4 1983009808
    %v49 = vunpack.c.0.s8 %v48
    %v50 = vlaneseq
    %v51 = vshrl.u32 %v50, 7
    %v52 = vsub.s32 %v49, %v51
    %v53 = vrot.slane %v44, %v52
    %v54 = vcombine.high %v53, %v53
    %vm57 = vcmask 1041408
    %v58 = vsel %vm57, %v53, 0.0
    %v59 = vsel %vm57, %v54, 0.0
    %v60 = vadd.f32 %v58, %v59
    %61 = vadd.xlane.f32.xlu0 %v60
    %v62 = vpop.xlane.xlu0 %61
    %v63 = vadd.f32 %v45, %v62
    %vm64 = vcmask 1024
    %65 = vst.msk [vmem:[%s2] sm:$0x3] %vm64, %v63
    // Predicated region
    $region22: #{tpu_custom_call.1} parent=1 // pred_check
      _
    $region23: #{tpu_custom_call.1} parent=1 // pred_check_branch
      %67 = sbr.rel (0) target = $region25
    $region24: #{tpu_custom_call.1} parent=1 // pred_region
      _
    $region25: #{tpu_custom_call.1} parent=1 // pred_fallthru
      _
    // Predicated region
    $region26: #{tpu_custom_call.1} parent=1 // pred_check
      _
    $region27: #{tpu_custom_call.1} parent=1 // pred_check_branch
      %69 = sbr.rel (0) target = $region29
    $region28: #{tpu_custom_call.1} parent=1 // pred_region
      _
    $region29: #{tpu_custom_call.1} parent=1 // pred_fallthru
      _
    %70 = vsyncpa [#allocation3], 1
    %71 = vsyncpa [#allocation5], 1

</llo_original>
